<compile_context>
chip_gen: v6e
topology: v6e:2x2x1
jax: 0.10.0
libtpu: 0.0.40
codegen_flags: <defaults>
</compile_context>

<pallas_src>
import jax
import jax.numpy as jnp
from jax import lax
from jax.experimental import pallas as pl
from jax.experimental.pallas import tpu as pltpu

_LANE = 128
_STATIC_UNROLL_MAX_K = 256               # fully-static j-loop up to this K
_VMEM_TILE_BUDGET = 16 * 1024 * 1024     # conservative: fits v5e/v6e/v7x scoped VMEM
_VMEM_LIMIT_BYTES = 32 * 1024 * 1024


def _round_up(x, m):
    return (x + m - 1) // m * m


def _choose_batch_tile(B, K):
    """Width of the lane-axis (batch) tile."""
    per_lane_bytes = 10 * K * 4          # ~10 live / double-buffered f32 (K, TB) tiles
    cap = (_VMEM_TILE_BUDGET // per_lane_bytes) // _LANE * _LANE
    cap = max(_LANE, min(cap, 2048))
    if B <= cap:
        if B > 2 * _LANE:
            # Split into >=2 lane-aligned tiles so both v7x TensorCores get work.
            half = _round_up(pl.cdiv(B, 2), _LANE)
            if half < B:
                return half
        return B                         # single tile: block == full array dims
    return cap


def _make_sparsemax_kernel(K):
    static_loop = K <= _STATIC_UNROLL_MAX_K

    def kernel(s_ref, o_ref):
        # s_ref / o_ref: (K, TB) tile of s^T -- batch on lanes, K on sublanes.
        s = s_ref[...].astype(jnp.float32)                       # (K, TB)
        zeros = jnp.zeros_like(s)

        def step(row, k_acc, S_acc):
            # row: (1, TB) value of s[j]; broadcast along sublanes inside the
            # compare/select.  Boolean ge + where: one select per term, no
            # bool->f32 convert + multiply on the hot tensor.
            ge = row >= s                                        # (K, TB) bool
            return (k_acc + jnp.where(ge, 1.0, 0.0),
                    S_acc + jnp.where(ge, row, 0.0))

        if static_loop:
            k_i, S_i = zeros, zeros
            for j in range(K):                                   # static slices only
                row = s_ref[j:j + 1, :].astype(jnp.float32)
                k_i, S_i = step(row, k_i, S_i)
        else:
            # Large-K path: bounded trace + VMEM via fori_loop over rows.
            def body(j, carry):
                row = s_ref[pl.ds(j, 1), :].astype(jnp.float32)
                return step(row, *carry)
            k_i, S_i = lax.fori_loop(0, K, body, (zeros, zeros))

        # Support test: 1 + k_i * s_i > S_i (tie groups all-in or all-out).
        in_support = (1.0 + k_i * s) > S_i                       # (K, TB) bool
        k_star = jnp.sum(jnp.where(in_support, 1.0, 0.0), axis=0, keepdims=True)
        sum_sup = jnp.sum(jnp.where(in_support, s, 0.0), axis=0, keepdims=True)
        # Ragged-overhang columns may hold garbage (k_star could even be 0);
        # any inf/NaN there lives only in lanes whose store is masked out.
        tau = (sum_sup - 1.0) / k_star                           # (1, TB)

        # Single lane-dense store of the whole tile.
        o_ref[...] = jnp.maximum(s - tau, 0.0).astype(o_ref.dtype)

    return kernel


def sparsemax_last_dim(s, *, interpret=False):
    """sparsemax(s, dim=-1) via a batch-on-lanes Pallas TPU kernel."""
    orig_shape = s.shape
    K = orig_shape[-1]
    s2 = s.reshape(-1, K)
    B = s2.shape[0]

    tb = _choose_batch_tile(B, K)
    grid = (pl.cdiv(B, tb),)

    st = s2.T                                                    # (K, B): batch on lanes
    out_t = pl.pallas_call(
        _make_sparsemax_kernel(K),
        out_shape=jax.ShapeDtypeStruct((K, B), s.dtype),
        grid=grid,
        in_specs=[pl.BlockSpec((K, tb), lambda i: (0, i))],
        out_specs=pl.BlockSpec((K, tb), lambda i: (0, i)),
        compiler_params=pltpu.CompilerParams(
            dimension_semantics=("parallel",),
            vmem_limit_bytes=_VMEM_LIMIT_BYTES),
        cost_estimate=pl.CostEstimate(
            flops=6 * B * K * K,
            transcendentals=0,
            bytes_accessed=2 * B * K * s.dtype.itemsize),
        interpret=interpret,
    )(st)
    return out_t.T.reshape(orig_shape)


def latent_sparsemax_forward(s, decoder=None, X=None, y=None):
    """Equivalent of LatentSparsemax.forward: z = sparsemax(s, dim=-1).

    `decoder`, `X`, `y` are accepted for signature parity but unused, exactly
    as in the PyTorch module's forward.
    """
    return sparsemax_last_dim(s)


def _sparsemax_ref(s):
    # Pure-JAX sorted reference (Martins & Astudillo 2016).
    s32 = s.astype(jnp.float32)
    K = s32.shape[-1]
    srt = -jnp.sort(-s32, axis=-1)                     # descending
    cs = jnp.cumsum(srt, axis=-1)
    ks = jnp.arange(1, K + 1, dtype=jnp.float32)
    support = (1.0 + ks * srt > cs).astype(jnp.float32)
    k_star = jnp.sum(support, axis=-1, keepdims=True)
    idx = (k_star - 1.0).astype(jnp.int32)
    cs_k = jnp.take_along_axis(cs, idx, axis=-1)
    tau = (cs_k - 1.0) / k_star
    return jnp.maximum(s32 - tau, 0.0).astype(s.dtype)


if __name__ == "__main__":
    # Shapes consistent with the synthetic model: `s` are per-sample cluster
    # logits; X / y only ride along in the forward signature.
    batch = 100
    n_clusters = 16
    n_features = 32
    n_classes = 8

    key = jax.random.PRNGKey(0)
    k_s, k_x, k_y = jax.random.split(key, 3)
    s = jax.random.normal(k_s, (batch, n_clusters), dtype=jnp.float32)
    X = jax.random.normal(k_x, (batch, n_features), dtype=jnp.float32)
    y = jax.random.randint(k_y, (batch,), 0, n_classes)

    z = latent_sparsemax_forward(s, decoder=None, X=X, y=y)
    z = jax.block_until_ready(z)

    z_ref = _sparsemax_ref(s)
    assert z.shape == (batch, n_clusters)
    assert jnp.allclose(z, z_ref, atol=1e-5, rtol=1e-5), "mismatch vs reference"
    assert bool(jnp.all(z >= 0.0))
    assert jnp.allclose(jnp.sum(z, axis=-1), 1.0, atol=1e-5)

    # Tie handling at the support boundary (duplicate values -> all-in/all-out).
    s_ties = jnp.array([[1.0, 1.0, 0.5, 0.5, -1.0, -1.0, 0.0, 0.0],
                        [2.0, 2.0, 2.0, 2.0, 2.0, 2.0, 2.0, 2.0],
                        [0.0, 0.0, 0.0, 0.0, 0.3, 0.3, 0.3, 0.3],
                        [5.0, -5.0, 5.0, -5.0, 5.0, -5.0, 5.0, -5.0]],
                       dtype=jnp.float32)
    z_t = jax.block_until_ready(sparsemax_last_dim(s_ties))
    assert jnp.allclose(z_t, _sparsemax_ref(s_ties), atol=1e-5, rtol=1e-5)

    # Larger case: multi-tile grid with a ragged (masked) last block.
    s_big = jax.random.normal(jax.random.PRNGKey(1), (400, 96), dtype=jnp.float32)
    z_big = jax.block_until_ready(sparsemax_last_dim(s_big))
    assert jnp.allclose(z_big, _sparsemax_ref(s_big), atol=1e-4, rtol=1e-4)
    assert jnp.allclose(jnp.sum(z_big, axis=-1), 1.0, atol=1e-4)

    print("KERNEL_OK")
</pallas_src>

<mosaic_0001>
module attributes {stable_mosaic.version = 11 : i64} {
  func.func @kernel(%arg0: i32, %arg1: memref<16x100xf32, #tpu.memory_space<vmem>>, %arg2: memref<16x100xf32, #tpu.memory_space<vmem>>) attributes {dimension_semantics = [#tpu.dimension_semantics<parallel>], iteration_bounds = array<i64: 1>, scalar_prefetch = 0 : i64, scratch_operands = 0 : i64, tpu.core_type = #tpu.core_type<tc>, window_params = [{transform_indices = @transform_0, window_bounds = array<i64: 16, 100>}, {transform_indices = @transform_1, window_bounds = array<i64: 16, 100>}]} {
    %c0 = arith.constant 0 : index
    %c0_0 = arith.constant 0 : index
    %0 = vector.load %arg1[%c0, %c0_0] : memref<16x100xf32, #tpu.memory_space<vmem>>, vector<16x100xf32>
    %cst = arith.constant 0.000000e+00 : f32
    %1 = vector.broadcast %cst : f32 to vector<16x100xf32>
    %c0_1 = arith.constant 0 : index
    %c0_2 = arith.constant 0 : index
    %2 = vector.load %arg1[%c0_1, %c0_2] : memref<16x100xf32, #tpu.memory_space<vmem>>, vector<1x100xf32>
    %3 = vector.broadcast %2 : vector<1x100xf32> to vector<16x100xf32>
    %4 = arith.cmpf oge, %3, %0 : vector<16x100xf32>
    %cst_3 = arith.constant 1.000000e+00 : f32
    %cst_4 = arith.constant 0.000000e+00 : f32
    %5 = vector.broadcast %cst_3 : f32 to vector<16x100xf32>
    %6 = vector.broadcast %cst_4 : f32 to vector<16x100xf32>
    %7 = arith.select %4, %5, %6 : vector<16x100xi1>, vector<16x100xf32>
    %8 = arith.addf %1, %7 : vector<16x100xf32>
    %cst_5 = arith.constant 0.000000e+00 : f32
    %9 = vector.shape_cast %2 : vector<1x100xf32> to vector<1x100xf32>
    %10 = vector.broadcast %9 : vector<1x100xf32> to vector<16x100xf32>
    %11 = vector.broadcast %cst_5 : f32 to vector<16x100xf32>
    %12 = arith.select %4, %10, %11 : vector<16x100xi1>, vector<16x100xf32>
    %13 = arith.addf %1, %12 : vector<16x100xf32>
    %c1 = arith.constant 1 : index
    %c0_6 = arith.constant 0 : index
    %14 = vector.load %arg1[%c1, %c0_6] : memref<16x100xf32, #tpu.memory_space<vmem>>, vector<1x100xf32>
    %15 = vector.broadcast %14 : vector<1x100xf32> to vector<16x100xf32>
    %16 = arith.cmpf oge, %15, %0 : vector<16x100xf32>
    %cst_7 = arith.constant 1.000000e+00 : f32
    %cst_8 = arith.constant 0.000000e+00 : f32
    %17 = vector.broadcast %cst_7 : f32 to vector<16x100xf32>
    %18 = vector.broadcast %cst_8 : f32 to vector<16x100xf32>
    %19 = arith.select %16, %17, %18 : vector<16x100xi1>, vector<16x100xf32>
    %20 = arith.addf %8, %19 : vector<16x100xf32>
    %cst_9 = arith.constant 0.000000e+00 : f32
    %21 = vector.shape_cast %14 : vector<1x100xf32> to vector<1x100xf32>
    %22 = vector.broadcast %21 : vector<1x100xf32> to vector<16x100xf32>
    %23 = vector.broadcast %cst_9 : f32 to vector<16x100xf32>
    %24 = arith.select %16, %22, %23 : vector<16x100xi1>, vector<16x100xf32>
    %25 = arith.addf %13, %24 : vector<16x100xf32>
    %c2 = arith.constant 2 : index
    %c0_10 = arith.constant 0 : index
    %26 = vector.load %arg1[%c2, %c0_10] : memref<16x100xf32, #tpu.memory_space<vmem>>, vector<1x100xf32>
    %27 = vector.broadcast %26 : vector<1x100xf32> to vector<16x100xf32>
    %28 = arith.cmpf oge, %27, %0 : vector<16x100xf32>
    %cst_11 = arith.constant 1.000000e+00 : f32
    %cst_12 = arith.constant 0.000000e+00 : f32
    %29 = vector.broadcast %cst_11 : f32 to vector<16x100xf32>
    %30 = vector.broadcast %cst_12 : f32 to vector<16x100xf32>
    %31 = arith.select %28, %29, %30 : vector<16x100xi1>, vector<16x100xf32>
    %32 = arith.addf %20, %31 : vector<16x100xf32>
    %cst_13 = arith.constant 0.000000e+00 : f32
    %33 = vector.shape_cast %26 : vector<1x100xf32> to vector<1x100xf32>
    %34 = vector.broadcast %33 : vector<1x100xf32> to vector<16x100xf32>
    %35 = vector.broadcast %cst_13 : f32 to vector<16x100xf32>
    %36 = arith.select %28, %34, %35 : vector<16x100xi1>, vector<16x100xf32>
    %37 = arith.addf %25, %36 : vector<16x100xf32>
    %c3 = arith.constant 3 : index
    %c0_14 = arith.constant 0 : index
    %38 = vector.load %arg1[%c3, %c0_14] : memref<16x100xf32, #tpu.memory_space<vmem>>, vector<1x100xf32>
    %39 = vector.broadcast %38 : vector<1x100xf32> to vector<16x100xf32>
    %40 = arith.cmpf oge, %39, %0 : vector<16x100xf32>
    %cst_15 = arith.constant 1.000000e+00 : f32
    %cst_16 = arith.constant 0.000000e+00 : f32
    %41 = vector.broadcast %cst_15 : f32 to vector<16x100xf32>
    %42 = vector.broadcast %cst_16 : f32 to vector<16x100xf32>
    %43 = arith.select %40, %41, %42 : vector<16x100xi1>, vector<16x100xf32>
    %44 = arith.addf %32, %43 : vector<16x100xf32>
    %cst_17 = arith.constant 0.000000e+00 : f32
    %45 = vector.shape_cast %38 : vector<1x100xf32> to vector<1x100xf32>
    %46 = vector.broadcast %45 : vector<1x100xf32> to vector<16x100xf32>
    %47 = vector.broadcast %cst_17 : f32 to vector<16x100xf32>
    %48 = arith.select %40, %46, %47 : vector<16x100xi1>, vector<16x100xf32>
    %49 = arith.addf %37, %48 : vector<16x100xf32>
    %c4 = arith.constant 4 : index
    %c0_18 = arith.constant 0 : index
    %50 = vector.load %arg1[%c4, %c0_18] : memref<16x100xf32, #tpu.memory_space<vmem>>, vector<1x100xf32>
    %51 = vector.broadcast %50 : vector<1x100xf32> to vector<16x100xf32>
    %52 = arith.cmpf oge, %51, %0 : vector<16x100xf32>
    %cst_19 = arith.constant 1.000000e+00 : f32
    %cst_20 = arith.constant 0.000000e+00 : f32
    %53 = vector.broadcast %cst_19 : f32 to vector<16x100xf32>
    %54 = vector.broadcast %cst_20 : f32 to vector<16x100xf32>
    %55 = arith.select %52, %53, %54 : vector<16x100xi1>, vector<16x100xf32>
    %56 = arith.addf %44, %55 : vector<16x100xf32>
    %cst_21 = arith.constant 0.000000e+00 : f32
    %57 = vector.shape_cast %50 : vector<1x100xf32> to vector<1x100xf32>
    %58 = vector.broadcast %57 : vector<1x100xf32> to vector<16x100xf32>
    %59 = vector.broadcast %cst_21 : f32 to vector<16x100xf32>
    %60 = arith.select %52, %58, %59 : vector<16x100xi1>, vector<16x100xf32>
    %61 = arith.addf %49, %60 : vector<16x100xf32>
    %c5 = arith.constant 5 : index
    %c0_22 = arith.constant 0 : index
    %62 = vector.load %arg1[%c5, %c0_22] : memref<16x100xf32, #tpu.memory_space<vmem>>, vector<1x100xf32>
    %63 = vector.broadcast %62 : vector<1x100xf32> to vector<16x100xf32>
    %64 = arith.cmpf oge, %63, %0 : vector<16x100xf32>
    %cst_23 = arith.constant 1.000000e+00 : f32
    %cst_24 = arith.constant 0.000000e+00 : f32
    %65 = vector.broadcast %cst_23 : f32 to vector<16x100xf32>
    %66 = vector.broadcast %cst_24 : f32 to vector<16x100xf32>
    %67 = arith.select %64, %65, %66 : vector<16x100xi1>, vector<16x100xf32>
    %68 = arith.addf %56, %67 : vector<16x100xf32>
    %cst_25 = arith.constant 0.000000e+00 : f32
    %69 = vector.shape_cast %62 : vector<1x100xf32> to vector<1x100xf32>
    %70 = vector.broadcast %69 : vector<1x100xf32> to vector<16x100xf32>
    %71 = vector.broadcast %cst_25 : f32 to vector<16x100xf32>
    %72 = arith.select %64, %70, %71 : vector<16x100xi1>, vector<16x100xf32>
    %73 = arith.addf %61, %72 : vector<16x100xf32>
    %c6 = arith.constant 6 : index
    %c0_26 = arith.constant 0 : index
    %74 = vector.load %arg1[%c6, %c0_26] : memref<16x100xf32, #tpu.memory_space<vmem>>, vector<1x100xf32>
    %75 = vector.broadcast %74 : vector<1x100xf32> to vector<16x100xf32>
    %76 = arith.cmpf oge, %75, %0 : vector<16x100xf32>
    %cst_27 = arith.constant 1.000000e+00 : f32
    %cst_28 = arith.constant 0.000000e+00 : f32
    %77 = vector.broadcast %cst_27 : f32 to vector<16x100xf32>
    %78 = vector.broadcast %cst_28 : f32 to vector<16x100xf32>
    %79 = arith.select %76, %77, %78 : vector<16x100xi1>, vector<16x100xf32>
    %80 = arith.addf %68, %79 : vector<16x100xf32>
    %cst_29 = arith.constant 0.000000e+00 : f32
    %81 = vector.shape_cast %74 : vector<1x100xf32> to vector<1x100xf32>
    %82 = vector.broadcast %81 : vector<1x100xf32> to vector<16x100xf32>
    %83 = vector.broadcast %cst_29 : f32 to vector<16x100xf32>
    %84 = arith.select %76, %82, %83 : vector<16x100xi1>, vector<16x100xf32>
    %85 = arith.addf %73, %84 : vector<16x100xf32>
    %c7 = arith.constant 7 : index
    %c0_30 = arith.constant 0 : index
    %86 = vector.load %arg1[%c7, %c0_30] : memref<16x100xf32, #tpu.memory_space<vmem>>, vector<1x100xf32>
    %87 = vector.broadcast %86 : vector<1x100xf32> to vector<16x100xf32>
    %88 = arith.cmpf oge, %87, %0 : vector<16x100xf32>
    %cst_31 = arith.constant 1.000000e+00 : f32
    %cst_32 = arith.constant 0.000000e+00 : f32
    %89 = vector.broadcast %cst_31 : f32 to vector<16x100xf32>
    %90 = vector.broadcast %cst_32 : f32 to vector<16x100xf32>
    %91 = arith.select %88, %89, %90 : vector<16x100xi1>, vector<16x100xf32>
    %92 = arith.addf %80, %91 : vector<16x100xf32>
    %cst_33 = arith.constant 0.000000e+00 : f32
    %93 = vector.shape_cast %86 : vector<1x100xf32> to vector<1x100xf32>
    %94 = vector.broadcast %93 : vector<1x100xf32> to vector<16x100xf32>
    %95 = vector.broadcast %cst_33 : f32 to vector<16x100xf32>
    %96 = arith.select %88, %94, %95 : vector<16x100xi1>, vector<16x100xf32>
    %97 = arith.addf %85, %96 : vector<16x100xf32>
    %c8 = arith.constant 8 : index
    %c0_34 = arith.constant 0 : index
    %98 = vector.load %arg1[%c8, %c0_34] : memref<16x100xf32, #tpu.memory_space<vmem>>, vector<1x100xf32>
    %99 = vector.broadcast %98 : vector<1x100xf32> to vector<16x100xf32>
    %100 = arith.cmpf oge, %99, %0 : vector<16x100xf32>
    %cst_35 = arith.constant 1.000000e+00 : f32
    %cst_36 = arith.constant 0.000000e+00 : f32
    %101 = vector.broadcast %cst_35 : f32 to vector<16x100xf32>
    %102 = vector.broadcast %cst_36 : f32 to vector<16x100xf32>
    %103 = arith.select %100, %101, %102 : vector<16x100xi1>, vector<16x100xf32>
    %104 = arith.addf %92, %103 : vector<16x100xf32>
    %cst_37 = arith.constant 0.000000e+00 : f32
    %105 = vector.shape_cast %98 : vector<1x100xf32> to vector<1x100xf32>
    %106 = vector.broadcast %105 : vector<1x100xf32> to vector<16x100xf32>
    %107 = vector.broadcast %cst_37 : f32 to vector<16x100xf32>
    %108 = arith.select %100, %106, %107 : vector<16x100xi1>, vector<16x100xf32>
    %109 = arith.addf %97, %108 : vector<16x100xf32>
    %c9 = arith.constant 9 : index
    %c0_38 = arith.constant 0 : index
    %110 = vector.load %arg1[%c9, %c0_38] : memref<16x100xf32, #tpu.memory_space<vmem>>, vector<1x100xf32>
    %111 = vector.broadcast %110 : vector<1x100xf32> to vector<16x100xf32>
    %112 = arith.cmpf oge, %111, %0 : vector<16x100xf32>
    %cst_39 = arith.constant 1.000000e+00 : f32
    %cst_40 = arith.constant 0.000000e+00 : f32
    %113 = vector.broadcast %cst_39 : f32 to vector<16x100xf32>
    %114 = vector.broadcast %cst_40 : f32 to vector<16x100xf32>
    %115 = arith.select %112, %113, %114 : vector<16x100xi1>, vector<16x100xf32>
    %116 = arith.addf %104, %115 : vector<16x100xf32>
    %cst_41 = arith.constant 0.000000e+00 : f32
    %117 = vector.shape_cast %110 : vector<1x100xf32> to vector<1x100xf32>
    %118 = vector.broadcast %117 : vector<1x100xf32> to vector<16x100xf32>
    %119 = vector.broadcast %cst_41 : f32 to vector<16x100xf32>
    %120 = arith.select %112, %118, %119 : vector<16x100xi1>, vector<16x100xf32>
    %121 = arith.addf %109, %120 : vector<16x100xf32>
    %c10 = arith.constant 10 : index
    %c0_42 = arith.constant 0 : index
    %122 = vector.load %arg1[%c10, %c0_42] : memref<16x100xf32, #tpu.memory_space<vmem>>, vector<1x100xf32>
    %123 = vector.broadcast %122 : vector<1x100xf32> to vector<16x100xf32>
    %124 = arith.cmpf oge, %123, %0 : vector<16x100xf32>
    %cst_43 = arith.constant 1.000000e+00 : f32
    %cst_44 = arith.constant 0.000000e+00 : f32
    %125 = vector.broadcast %cst_43 : f32 to vector<16x100xf32>
    %126 = vector.broadcast %cst_44 : f32 to vector<16x100xf32>
    %127 = arith.select %124, %125, %126 : vector<16x100xi1>, vector<16x100xf32>
    %128 = arith.addf %116, %127 : vector<16x100xf32>
    %cst_45 = arith.constant 0.000000e+00 : f32
    %129 = vector.shape_cast %122 : vector<1x100xf32> to vector<1x100xf32>
    %130 = vector.broadcast %129 : vector<1x100xf32> to vector<16x100xf32>
    %131 = vector.broadcast %cst_45 : f32 to vector<16x100xf32>
    %132 = arith.select %124, %130, %131 : vector<16x100xi1>, vector<16x100xf32>
    %133 = arith.addf %121, %132 : vector<16x100xf32>
    %c11 = arith.constant 11 : index
    %c0_46 = arith.constant 0 : index
    %134 = vector.load %arg1[%c11, %c0_46] : memref<16x100xf32, #tpu.memory_space<vmem>>, vector<1x100xf32>
    %135 = vector.broadcast %134 : vector<1x100xf32> to vector<16x100xf32>
    %136 = arith.cmpf oge, %135, %0 : vector<16x100xf32>
    %cst_47 = arith.constant 1.000000e+00 : f32
    %cst_48 = arith.constant 0.000000e+00 : f32
    %137 = vector.broadcast %cst_47 : f32 to vector<16x100xf32>
    %138 = vector.broadcast %cst_48 : f32 to vector<16x100xf32>
    %139 = arith.select %136, %137, %138 : vector<16x100xi1>, vector<16x100xf32>
    %140 = arith.addf %128, %139 : vector<16x100xf32>
    %cst_49 = arith.constant 0.000000e+00 : f32
    %141 = vector.shape_cast %134 : vector<1x100xf32> to vector<1x100xf32>
    %142 = vector.broadcast %141 : vector<1x100xf32> to vector<16x100xf32>
    %143 = vector.broadcast %cst_49 : f32 to vector<16x100xf32>
    %144 = arith.select %136, %142, %143 : vector<16x100xi1>, vector<16x100xf32>
    %145 = arith.addf %133, %144 : vector<16x100xf32>
    %c12 = arith.constant 12 : index
    %c0_50 = arith.constant 0 : index
    %146 = vector.load %arg1[%c12, %c0_50] : memref<16x100xf32, #tpu.memory_space<vmem>>, vector<1x100xf32>
    %147 = vector.broadcast %146 : vector<1x100xf32> to vector<16x100xf32>
    %148 = arith.cmpf oge, %147, %0 : vector<16x100xf32>
    %cst_51 = arith.constant 1.000000e+00 : f32
    %cst_52 = arith.constant 0.000000e+00 : f32
    %149 = vector.broadcast %cst_51 : f32 to vector<16x100xf32>
    %150 = vector.broadcast %cst_52 : f32 to vector<16x100xf32>
    %151 = arith.select %148, %149, %150 : vector<16x100xi1>, vector<16x100xf32>
    %152 = arith.addf %140, %151 : vector<16x100xf32>
    %cst_53 = arith.constant 0.000000e+00 : f32
    %153 = vector.shape_cast %146 : vector<1x100xf32> to vector<1x100xf32>
    %154 = vector.broadcast %153 : vector<1x100xf32> to vector<16x100xf32>
    %155 = vector.broadcast %cst_53 : f32 to vector<16x100xf32>
    %156 = arith.select %148, %154, %155 : vector<16x100xi1>, vector<16x100xf32>
    %157 = arith.addf %145, %156 : vector<16x100xf32>
    %c13 = arith.constant 13 : index
    %c0_54 = arith.constant 0 : index
    %158 = vector.load %arg1[%c13, %c0_54] : memref<16x100xf32, #tpu.memory_space<vmem>>, vector<1x100xf32>
    %159 = vector.broadcast %158 : vector<1x100xf32> to vector<16x100xf32>
    %160 = arith.cmpf oge, %159, %0 : vector<16x100xf32>
    %cst_55 = arith.constant 1.000000e+00 : f32
    %cst_56 = arith.constant 0.000000e+00 : f32
    %161 = vector.broadcast %cst_55 : f32 to vector<16x100xf32>
    %162 = vector.broadcast %cst_56 : f32 to vector<16x100xf32>
    %163 = arith.select %160, %161, %162 : vector<16x100xi1>, vector<16x100xf32>
    %164 = arith.addf %152, %163 : vector<16x100xf32>
    %cst_57 = arith.constant 0.000000e+00 : f32
    %165 = vector.shape_cast %158 : vector<1x100xf32> to vector<1x100xf32>
    %166 = vector.broadcast %165 : vector<1x100xf32> to vector<16x100xf32>
    %167 = vector.broadcast %cst_57 : f32 to vector<16x100xf32>
    %168 = arith.select %160, %166, %167 : vector<16x100xi1>, vector<16x100xf32>
    %169 = arith.addf %157, %168 : vector<16x100xf32>
    %c14 = arith.constant 14 : index
    %c0_58 = arith.constant 0 : index
    %170 = vector.load %arg1[%c14, %c0_58] : memref<16x100xf32, #tpu.memory_space<vmem>>, vector<1x100xf32>
    %171 = vector.broadcast %170 : vector<1x100xf32> to vector<16x100xf32>
    %172 = arith.cmpf oge, %171, %0 : vector<16x100xf32>
    %cst_59 = arith.constant 1.000000e+00 : f32
    %cst_60 = arith.constant 0.000000e+00 : f32
    %173 = vector.broadcast %cst_59 : f32 to vector<16x100xf32>
    %174 = vector.broadcast %cst_60 : f32 to vector<16x100xf32>
    %175 = arith.select %172, %173, %174 : vector<16x100xi1>, vector<16x100xf32>
    %176 = arith.addf %164, %175 : vector<16x100xf32>
    %cst_61 = arith.constant 0.000000e+00 : f32
    %177 = vector.shape_cast %170 : vector<1x100xf32> to vector<1x100xf32>
    %178 = vector.broadcast %177 : vector<1x100xf32> to vector<16x100xf32>
    %179 = vector.broadcast %cst_61 : f32 to vector<16x100xf32>
    %180 = arith.select %172, %178, %179 : vector<16x100xi1>, vector<16x100xf32>
    %181 = arith.addf %169, %180 : vector<16x100xf32>
    %c15 = arith.constant 15 : index
    %c0_62 = arith.constant 0 : index
    %182 = vector.load %arg1[%c15, %c0_62] : memref<16x100xf32, #tpu.memory_space<vmem>>, vector<1x100xf32>
    %183 = vector.broadcast %182 : vector<1x100xf32> to vector<16x100xf32>
    %184 = arith.cmpf oge, %183, %0 : vector<16x100xf32>
    %cst_63 = arith.constant 1.000000e+00 : f32
    %cst_64 = arith.constant 0.000000e+00 : f32
    %185 = vector.broadcast %cst_63 : f32 to vector<16x100xf32>
    %186 = vector.broadcast %cst_64 : f32 to vector<16x100xf32>
    %187 = arith.select %184, %185, %186 : vector<16x100xi1>, vector<16x100xf32>
    %188 = arith.addf %176, %187 : vector<16x100xf32>
    %cst_65 = arith.constant 0.000000e+00 : f32
    %189 = vector.shape_cast %182 : vector<1x100xf32> to vector<1x100xf32>
    %190 = vector.broadcast %189 : vector<1x100xf32> to vector<16x100xf32>
    %191 = vector.broadcast %cst_65 : f32 to vector<16x100xf32>
    %192 = arith.select %184, %190, %191 : vector<16x100xi1>, vector<16x100xf32>
    %193 = arith.addf %181, %192 : vector<16x100xf32>
    %194 = arith.mulf %188, %0 : vector<16x100xf32>
    %cst_66 = arith.constant 1.000000e+00 : f32
    %195 = vector.broadcast %cst_66 : f32 to vector<16x100xf32>
    %196 = arith.addf %195, %194 : vector<16x100xf32>
    %197 = arith.cmpf ogt, %196, %193 : vector<16x100xf32>
    %cst_67 = arith.constant 1.000000e+00 : f32
    %cst_68 = arith.constant 0.000000e+00 : f32
    %198 = vector.broadcast %cst_67 : f32 to vector<16x100xf32>
    %199 = vector.broadcast %cst_68 : f32 to vector<16x100xf32>
    %200 = arith.select %197, %198, %199 : vector<16x100xi1>, vector<16x100xf32>
    %cst_69 = arith.constant dense<0.000000e+00> : vector<100xf32>
    %201 = vector.multi_reduction <add>, %200, %cst_69 [0] : vector<16x100xf32> to vector<100xf32>
    %202 = vector.shape_cast %201 : vector<100xf32> to vector<1x100xf32>
    %cst_70 = arith.constant 0.000000e+00 : f32
    %203 = vector.broadcast %cst_70 : f32 to vector<16x100xf32>
    %204 = arith.select %197, %0, %203 : vector<16x100xi1>, vector<16x100xf32>
    %cst_71 = arith.constant dense<0.000000e+00> : vector<100xf32>
    %205 = vector.multi_reduction <add>, %204, %cst_71 [0] : vector<16x100xf32> to vector<100xf32>
    %206 = vector.shape_cast %205 : vector<100xf32> to vector<1x100xf32>
    %cst_72 = arith.constant 1.000000e+00 : f32
    %207 = vector.broadcast %cst_72 : f32 to vector<1x100xf32>
    %208 = arith.subf %206, %207 : vector<1x100xf32>
    %209 = arith.divf %208, %202 : vector<1x100xf32>
    %210 = vector.broadcast %209 : vector<1x100xf32> to vector<16x100xf32>
    %211 = arith.subf %0, %210 : vector<16x100xf32>
    %cst_73 = arith.constant 0.000000e+00 : f32
    %212 = vector.broadcast %cst_73 : f32 to vector<16x100xf32>
    %213 = arith.maximumf %211, %212 : vector<16x100xf32>
    %c0_74 = arith.constant 0 : index
    %c0_75 = arith.constant 0 : index
    %214 = vector.load %arg2[%c0_74, %c0_75] : memref<16x100xf32, #tpu.memory_space<vmem>>, vector<16x100xf32>
    tpu.vector_store %arg2[%c0_74, %c0_75], %213 {strides = array<i32>} : memref<16x100xf32, #tpu.memory_space<vmem>>, vector<16x100xf32>,
    return
  }
  func.func @transform_0(%arg0: i32) -> (i32, i32) {
    %c0_i32 = arith.constant 0 : i32
    %c0_i32_0 = arith.constant 0 : i32
    return %c0_i32, %arg0 : i32, i32
  }
  func.func @transform_1(%arg0: i32) -> (i32, i32) {
    %c0_i32 = arith.constant 0 : i32
    %c0_i32_0 = arith.constant 0 : i32
    return %c0_i32, %arg0 : i32, i32
  }
}

</mosaic_0001>

<llo_original>
// kernel: tpu_custom_call.1
$region0: #{tpu_custom_call.1}
  #allocation0 [shape = 'u32[]', space=smem, size = 0x4, offset = 0x4, fixed_abs, tag = 'smem constant byte address 0x4 - core index']
  #allocation1 [shape = 'u32[144,128]{1,0:T(1,128)}', space=vmem, size = 0x12000, scoped, tag = 'internal scratch']
  %s0 = inlined_call_operand.hbm [shape: f32[16,100], index: 0, kind: input, shape index: {}]
  %s1 = inlined_call_operand.hbm [shape: f32[16,100], index: 1, kind: output, shape index: {}]
  %s2 = sld [smem:[#allocation0]]
  $region18: #{tpu_custom_call.1} parent=0
    _
  %s4 = ssub.s32 1, %s2
  %s5 = scalar_select 0, %s4, %s2
  $region1: #{tpu_custom_call.1} parent=0
    #allocation2 [shape = 'u8[8192]{0}', space=vmem, size = 0x2000, scoped, tag = 'input window, operand 0, single buffered']
    #allocation3 [shape = 's32[1]{0}', space=sflag, size = 0x4, scoped, tag = 'scoped memory for tpu_custom_call.1']
    #allocation4 [shape = 's32[1]{0}', space=sflag, size = 0x4, scoped, tag = 'scoped memory for tpu_custom_call.1']
    #allocation5 [shape = 'u8[8192]{0}', space=vmem, size = 0x2000, scoped, tag = 'output window, operand 0, single buffered']
    %6 = vsyncpa [#allocation3], 0
    %7 = vsyncpa [#allocation4], 0
    // Predicated region
    $region2: #{tpu_custom_call.1} parent=1 // pred_check
      _
    $region3: #{tpu_custom_call.1} parent=1 // pred_check_branch
      %9 = sbr.rel (0) target = $region5
    $region4: #{tpu_custom_call.1} parent=1 // pred_region
      %s11 = ssub.s32 256, 256
      %12 = vsyncadd [#allocation3], %s11
      %s13 = sshll.u32 [#allocation2], 4
      %s14 = int_to_ptr.vmem [resolvable:$true] %s13
      %19 = dma.hbm_to_vmem [thread:$0]  %s0, 256, %s14, [#allocation3], 128, 128, 8
    $region5: #{tpu_custom_call.1} parent=1 // pred_fallthru
      _
    // Predicated region
    $region6: #{tpu_custom_call.1} parent=1 // pred_check
      _
    $region7: #{tpu_custom_call.1} parent=1 // pred_check_branch
      %21 = sbr.rel (0) target = $region9
    $region8: #{tpu_custom_call.1} parent=1 // pred_region
      %22 = dma.done [#allocation3], 256
    $region9: #{tpu_custom_call.1} parent=1 // pred_fallthru
      _
    %v23 = vld [vmem:[#allocation2] sm:$0xff]
    %v24 = vld [vmem:[#allocation2 + $0x8] sm:$0xff]
    %v25 = vld [vmem:[#allocation2] sm:$0x1]
    %v26 = vlaneseq
    %v27 = vshrl.u32 %v26, 7
    %v28 = vsub.s32 0, %v27
    %v29 = vrot.slane %v25, %v28
    %vm30 = vcmp.ge.f32.partialorder %v29, %v23
    %vm31 = vcmp.ge.f32.partialorder %v29, %v24
    %v32 = vsel %vm30, 1.0, 0.0
    %v33 = vsel %vm31, 1.0, 0.0
    %v34 = vadd.f32 %v32, 0.0
    %v35 = vadd.f32 %v33, 0.0
    %v36 = vsel %vm30, %v29, 0.0
    %v37 = vsel %vm31, %v29, 0.0
    %v38 = vadd.f32 %v36, 0.0
    %v39 = vadd.f32 %v37, 0.0
    %v40 = vld [vmem:[#allocation2 + $0x1] sm:$0x1]
    %v41 = vlaneseq
    %v42 = vshrl.u32 %v41, 7
    %v43 = vsub.s32 0, %v42
    %v44 = vrot.slane %v40, %v43
    %vm45 = vcmp.ge.f32.partialorder %v44, %v23
    %vm46 = vcmp.ge.f32.partialorder %v44, %v24
    %v47 = vsel %vm45, 1.0, 0.0
    %v48 = vsel %vm46, 1.0, 0.0
    %v49 = vadd.f32 %v34, %v47
    %v50 = vadd.f32 %v35, %v48
    %v51 = vsel %vm45, %v44, 0.0
    %v52 = vsel %vm46, %v44, 0.0
    %v53 = vadd.f32 %v38, %v51
    %v54 = vadd.f32 %v39, %v52
    %v55 = vld [vmem:[#allocation2 + $0x2] sm:$0x1]
    %v56 = vlaneseq
    %v57 = vshrl.u32 %v56, 7
    %v58 = vsub.s32 0, %v57
    %v59 = vrot.slane %v55, %v58
    %vm60 = vcmp.ge.f32.partialorder %v59, %v23
    %vm61 = vcmp.ge.f32.partialorder %v59, %v24
    %v62 = vsel %vm60, 1.0, 0.0
    %v63 = vsel %vm61, 1.0, 0.0
    %v64 = vadd.f32 %v49, %v62
    %v65 = vadd.f32 %v50, %v63
    %v66 = vsel %vm60, %v59, 0.0
    %v67 = vsel %vm61, %v59, 0.0
    %v68 = vadd.f32 %v53, %v66
    %v69 = vadd.f32 %v54, %v67
    %v70 = vld [vmem:[#allocation2 + $0x3] sm:$0x1]
    %v71 = vlaneseq
    %v72 = vshrl.u32 %v71, 7
    %v73 = vsub.s32 0, %v72
    %v74 = vrot.slane %v70, %v73
    %vm75 = vcmp.ge.f32.partialorder %v74, %v23
    %vm76 = vcmp.ge.f32.partialorder %v74, %v24
    %v77 = vsel %vm75, 1.0, 0.0
    %v78 = vsel %vm76, 1.0, 0.0
    %v79 = vadd.f32 %v64, %v77
    %v80 = vadd.f32 %v65, %v78
    %v81 = vsel %vm75, %v74, 0.0
    %v82 = vsel %vm76, %v74, 0.0
    %v83 = vadd.f32 %v68, %v81
    %v84 = vadd.f32 %v69, %v82
    %v85 = vld [vmem:[#allocation2 + $0x4] sm:$0x1]
    %v86 = vlaneseq
    %v87 = vshrl.u32 %v86, 7
    %v88 = vsub.s32 0, %v87
    %v89 = vrot.slane %v85, %v88
    %vm90 = vcmp.ge.f32.partialorder %v89, %v23
    %vm91 = vcmp.ge.f32.partialorder %v89, %v24
    %v92 = vsel %vm90, 1.0, 0.0
    %v93 = vsel %vm91, 1.0, 0.0
    %v94 = vadd.f32 %v79, %v92
    %v95 = vadd.f32 %v80, %v93
    %v96 = vsel %vm90, %v89, 0.0
    %v97 = vsel %vm91, %v89, 0.0
    %v98 = vadd.f32 %v83, %v96
    %v99 = vadd.f32 %v84, %v97
    %v100 = vld [vmem:[#allocation2 + $0x5] sm:$0x1]
    %v101 = vlaneseq
    %v102 = vshrl.u32 %v101, 7
    %v103 = vsub.s32 0, %v102
    %v104 = vrot.slane %v100, %v103
    %vm105 = vcmp.ge.f32.partialorder %v104, %v23
    %vm106 = vcmp.ge.f32.partialorder %v104, %v24
    %v107 = vsel %vm105, 1.0, 0.0
    %v108 = vsel %vm106, 1.0, 0.0
    %v109 = vadd.f32 %v94, %v107
    %v110 = vadd.f32 %v95, %v108
    %v111 = vsel %vm105, %v104, 0.0
    %v112 = vsel %vm106, %v104, 0.0
    %v113 = vadd.f32 %v98, %v111
    %v114 = vadd.f32 %v99, %v112
    %v115 = vld [vmem:[#allocation2 + $0x6] sm:$0x1]
    %v116 = vlaneseq
    %v117 = vshrl.u32 %v116, 7
    %v118 = vsub.s32 0, %v117
    %v119 = vrot.slane %v115, %v118
    %vm120 = vcmp.ge.f32.partialorder %v119, %v23
    %vm121 = vcmp.ge.f32.partialorder %v119, %v24
    %v122 = vsel %vm120, 1.0, 0.0
    %v123 = vsel %vm121, 1.0, 0.0
    %v124 = vadd.f32 %v109, %v122
    %v125 = vadd.f32 %v110, %v123
    %v126 = vsel %vm120, %v119, 0.0
    %v127 = vsel %vm121, %v119, 0.0
    %v128 = vadd.f32 %v113, %v126
    %v129 = vadd.f32 %v114, %v127
    %v130 = vld [vmem:[#allocation2 + $0x7] sm:$0x1]
    %v131 = vlaneseq
    %v132 = vshrl.u32 %v131, 7
    %v133 = vsub.s32 0, %v132
    %v134 = vrot.slane %v130, %v133
    %vm135 = vcmp.ge.f32.partialorder %v134, %v23
    %vm136 = vcmp.ge.f32.partialorder %v134, %v24
    %v137 = vsel %vm135, 1.0, 0.0
    %v138 = vsel %vm136, 1.0, 0.0
    %v139 = vadd.f32 %v124, %v137
    %v140 = vadd.f32 %v125, %v138
    %v141 = vsel %vm135, %v134, 0.0
    %v142 = vsel %vm136, %v134, 0.0
    %v143 = vadd.f32 %v128, %v141
    %v144 = vadd.f32 %v129, %v142
    %v145 = vld [vmem:[#allocation2 + $0x8] sm:$0x1]
    %v146 = vlaneseq
    %v147 = vshrl.u32 %v146, 7
    %v148 = vsub.s32 0, %v147
    %v149 = vrot.slane %v145, %v148
    %vm150 = vcmp.ge.f32.partialorder %v149, %v23
    %vm151 = vcmp.ge.f32.partialorder %v149, %v24
    %v152 = vsel %vm150, 1.0, 0.0
    %v153 = vsel %vm151, 1.0, 0.0
    %v154 = vadd.f32 %v139, %v152
    %v155 = vadd.f32 %v140, %v153
    %v156 = vsel %vm150, %v149, 0.0
    %v157 = vsel %vm151, %v149, 0.0
    %v158 = vadd.f32 %v143, %v156
    %v159 = vadd.f32 %v144, %v157
    %v160 = vld [vmem:[#allocation2 + $0x9] sm:$0x1]
    %v161 = vlaneseq
    %v162 = vshrl.u32 %v161, 7
    %v163 = vsub.s32 0, %v162
    %v164 = vrot.slane %v160, %v163
    %vm165 = vcmp.ge.f32.partialorder %v164, %v23
    %vm166 = vcmp.ge.f32.partialorder %v164, %v24
    %v167 = vsel %vm165, 1.0, 0.0
    %v168 = vsel %vm166, 1.0, 0.0
    %v169 = vadd.f32 %v154, %v167
    %v170 = vadd.f32 %v155, %v168
    %v171 = vsel %vm165, %v164, 0.0
    %v172 = vsel %vm166, %v164, 0.0
    %v173 = vadd.f32 %v158, %v171
    %v174 = vadd.f32 %v159, %v172
    %v175 = vld [vmem:[#allocation2 + $0xa] sm:$0x1]
    %v176 = vlaneseq
    %v177 = vshrl.u32 %v176, 7
    %v178 = vsub.s32 0, %v177
    %v179 = vrot.slane %v175, %v178
    %vm180 = vcmp.ge.f32.partialorder %v179, %v23
    %vm181 = vcmp.ge.f32.partialorder %v179, %v24
    %v182 = vsel %vm180, 1.0, 0.0
    %v183 = vsel %vm181, 1.0, 0.0
    %v184 = vadd.f32 %v169, %v182
    %v185 = vadd.f32 %v170, %v183
    %v186 = vsel %vm180, %v179, 0.0
    %v187 = vsel %vm181, %v179, 0.0
    %v188 = vadd.f32 %v173, %v186
    %v189 = vadd.f32 %v174, %v187
    %v190 = vld [vmem:[#allocation2 + $0xb] sm:$0x1]
    %v191 = vlaneseq
    %v192 = vshrl.u32 %v191, 7
    %v193 = vsub.s32 0, %v192
    %v194 = vrot.slane %v190, %v193
    %vm195 = vcmp.ge.f32.partialorder %v194, %v23
    %vm196 = vcmp.ge.f32.partialorder %v194, %v24
    %v197 = vsel %vm195, 1.0, 0.0
    %v198 = vsel %vm196, 1.0, 0.0
    %v199 = vadd.f32 %v184, %v197
    %v200 = vadd.f32 %v185, %v198
    %v201 = vsel %vm195, %v194, 0.0
    %v202 = vsel %vm196, %v194, 0.0
    %v203 = vadd.f32 %v188, %v201
    %v204 = vadd.f32 %v189, %v202
    %v205 = vld [vmem:[#allocation2 + $0xc] sm:$0x1]
    %v206 = vlaneseq
    %v207 = vshrl.u32 %v206, 7
    %v208 = vsub.s32 0, %v207
    %v209 = vrot.slane %v205, %v208
    %vm210 = vcmp.ge.f32.partialorder %v209, %v23
    %vm211 = vcmp.ge.f32.partialorder %v209, %v24
    %v212 = vsel %vm210, 1.0, 0.0
    %v213 = vsel %vm211, 1.0, 0.0
    %v214 = vadd.f32 %v199, %v212
    %v215 = vadd.f32 %v200, %v213
    %v216 = vsel %vm210, %v209, 0.0
    %v217 = vsel %vm211, %v209, 0.0
    %v218 = vadd.f32 %v203, %v216
    %v219 = vadd.f32 %v204, %v217
    %v220 = vld [vmem:[#allocation2 + $0xd] sm:$0x1]
    %v221 = vlaneseq
    %v222 = vshrl.u32 %v221, 7
    %v223 = vsub.s32 0, %v222
    %v224 = vrot.slane %v220, %v223
    %vm225 = vcmp.ge.f32.partialorder %v224, %v23
    %vm226 = vcmp.ge.f32.partialorder %v224, %v24
    %v227 = vsel %vm225, 1.0, 0.0
    %v228 = vsel %vm226, 1.0, 0.0
    %v229 = vadd.f32 %v214, %v227
    %v230 = vadd.f32 %v215, %v228
    %v231 = vsel %vm225, %v224, 0.0
    %v232 = vsel %vm226, %v224, 0.0
    %v233 = vadd.f32 %v218, %v231
    %v234 = vadd.f32 %v219, %v232
    %v235 = vld [vmem:[#allocation2 + $0xe] sm:$0x1]
    %v236 = vlaneseq
    %v237 = vshrl.u32 %v236, 7
    %v238 = vsub.s32 0, %v237
    %v239 = vrot.slane %v235, %v238
    %vm240 = vcmp.ge.f32.partialorder %v239, %v23
    %vm241 = vcmp.ge.f32.partialorder %v239, %v24
    %v242 = vsel %vm240, 1.0, 0.0
    %v243 = vsel %vm241, 1.0, 0.0
    %v244 = vadd.f32 %v229, %v242
    %v245 = vadd.f32 %v230, %v243
    %v246 = vsel %vm240, %v239, 0.0
    %v247 = vsel %vm241, %v239, 0.0
    %v248 = vadd.f32 %v233, %v246
    %v249 = vadd.f32 %v234, %v247
    %v250 = vld [vmem:[#allocation2 + $0xf] sm:$0x1]
    %v251 = vlaneseq
    %v252 = vshrl.u32 %v251, 7
    %v253 = vsub.s32 0, %v252
    %v254 = vrot.slane %v250, %v253
    %vm255 = vcmp.ge.f32.partialorder %v254, %v23
    %vm256 = vcmp.ge.f32.partialorder %v254, %v24
    %v257 = vsel %vm255, 1.0, 0.0
    %v258 = vsel %vm256, 1.0, 0.0
    %v259 = vadd.f32 %v244, %v257
    %v260 = vadd.f32 %v245, %v258
    %v261 = vsel %vm255, %v254, 0.0
    %v262 = vsel %vm256, %v254, 0.0
    %v263 = vadd.f32 %v248, %v261
    %v264 = vadd.f32 %v249, %v262
    %v265 = vmul.f32 %v259, %v23
    %v266 = vmul.f32 %v260, %v24
    %v267 = vadd.f32 %v265, 1.0
    %v268 = vadd.f32 %v266, 1.0
    %vm269 = vcmp.gt.f32.partialorder %v267, %v263
    %vm270 = vcmp.gt.f32.partialorder %v268, %v264
    %v271 = vsel %vm269, 1.0, 0.0
    %v272 = vsel %vm270, 1.0, 0.0
    %vm273 = vcmask 818176
    %v274 = vsel %vm273, %v271, 0.0
    %v275 = vsel %vm273, %v272, 0.0
    %v276 = vadd.f32 %v274, %v275
    %v277 = vrot.slane %v276, 4
    %v278 = vadd.f32 %v276, %v277
    %v279 = vrot.slane %v278, 2
    %v280 = vadd.f32 %v278, %v279
    %v281 = vrot.slane %v280, 1
    %v282 = vadd.f32 %v280, %v281
    %v283 = vsel %vm269, %v23, 0.0
    %v284 = vsel %vm270, %v24, 0.0
    %v285 = vsel %vm273, %v283, 0.0
    %v286 = vsel %vm273, %v284, 0.0
    %v287 = vadd.f32 %v285, %v286
    %v288 = vrot.slane %v287, 4
    %v289 = vadd.f32 %v287, %v288
    %v290 = vrot.slane %v289, 2
    %v291 = vadd.f32 %v289, %v290
    %v292 = vrot.slane %v291, 1
    %v293 = vadd.f32 %v291, %v292
    %v294 = vsub.f32 %v293, 1.0
    %v295 = vrcp.pop %v282
    %v296 = vmul.f32 %v294, %v295
    %v297 = vsub.f32 %v23, %v296
    %v298 = vsub.f32 %v24, %v296
    %v299 = vmax.f32 %v297, 0.0
    %v300 = vmax.f32 %v298, 0.0
    %301 = vst.msk [vmem:[#allocation5] sm:$0xff] %vm273, %v299
    %302 = vst.msk [vmem:[#allocation5 + $0x8] sm:$0xff] %vm273, %v300
    // Predicated region
    $region10: #{tpu_custom_call.1} parent=1 // pred_check
      _
    $region11: #{tpu_custom_call.1} parent=1 // pred_check_branch
      %304 = sbr.rel (0) target = $region13
    $region12: #{tpu_custom_call.1} parent=1 // pred_region
      %s306 = ssub.s32 256, 256
      %307 = vsyncadd [#allocation4], %s306
      %s308 = sshll.u32 [#allocation5], 4
      %s309 = int_to_ptr.vmem [resolvable:$true] %s308
      %314 = dma.vmem_to_hbm [thread:$0]  %s309, 256, %s1, [#allocation4], 128, 128, 8
    $region13: #{tpu_custom_call.1} parent=1 // pred_fallthru
      _
    // Predicated region
    $region14: #{tpu_custom_call.1} parent=1 // pred_check
      _
    $region15: #{tpu_custom_call.1} parent=1 // pred_check_branch
      %316 = sbr.rel (0) target = $region17
    $region16: #{tpu_custom_call.1} parent=1 // pred_region
      %317 = dma.done [#allocation4], 256
    $region17: #{tpu_custom_call.1} parent=1 // pred_fallthru
      _
    %318 = vsyncpa [#allocation3], 1
    %319 = vsyncpa [#allocation4], 1

</llo_original>
